<compile_context>
chip_gen: v7x
topology: tpu7x:2x2x1
jax: 0.10.0
libtpu: 0.0.40
codegen_flags: <defaults>
</compile_context>

<pallas_src>
import functools

import jax
import jax.numpy as jnp
from jax import lax
from jax.experimental import pallas as pl
from jax.experimental.pallas import tpu as pltpu


def _round_up(x, m):
    return ((x + m - 1) // m) * m


# ----------------------------------------------------------------------------
# Kernel 1: confusion matrix from the last-layer weight (makeConfusion).
# ----------------------------------------------------------------------------
# TODO(synk): single-shot (whole W and C x C output in VMEM); tile over output
# row blocks if the class count grows to multiple thousands. Init-only path.
def _confusion_kernel(w_ref, out_ref, *, T):
    w = w_ref[...].astype(jnp.float32)                        # (C, H)
    C = w.shape[0]

    # Row-normalize with rsqrt (one EUP op per row instead of a divide).
    sumsq = jnp.sum(w * w, axis=-1, keepdims=True)            # (C, 1)
    wn = w * lax.rsqrt(jnp.maximum(sumsq, 1e-12))

    # Cosine similarity sim = wn @ wn^T on the MXU: bf16 operands, f32
    # accumulation, contraction on H for both sides (no transpose copy).
    wn_bf = wn.astype(jnp.bfloat16)
    sim = lax.dot_general(
        wn_bf, wn_bf,
        dimension_numbers=(((1,), (1,)), ((), ())),
        preferred_element_type=jnp.float32) * T               # (C, C)

    # Stable exp: shift by T (the row max / exact diagonal value); the shift
    # cancels in the normalization and makes exp(diag) == 1 analytically,
    # so no masked diagonal reduction is needed.
    e = jnp.exp(sim - T)
    row_sum = jnp.sum(e, axis=-1, keepdims=True)              # (C, 1)
    inv = pl.reciprocal(jnp.maximum(row_sum - 1.0, 1e-20), approx=True)

    conf = e * inv                                            # C^2 VPU muls
    rows = lax.broadcasted_iota(jnp.int32, (C, C), 0)
    cols = lax.broadcasted_iota(jnp.int32, (C, C), 1)
    out_ref[...] = jnp.where(rows == cols, 0.0, conf)         # zero diagonal


def make_confusion(weight, T=1.0):
    C, _H = weight.shape
    return pl.pallas_call(
        functools.partial(_confusion_kernel, T=float(T)),
        out_shape=jax.ShapeDtypeStruct((C, C), jnp.float32),
        in_specs=[pl.BlockSpec(memory_space=pltpu.MemorySpace.VMEM)],
        out_specs=pl.BlockSpec(memory_space=pltpu.MemorySpace.VMEM),
    )(weight)


# ----------------------------------------------------------------------------
# Kernel 2: fused loss
#   loss = mean_b( -confidence*logp[b, t_b] - smoothing*sum_c diri[b,c]*logp[b,c] )
# Gridded over the batch; accumulates a scalar across grid steps.
# ----------------------------------------------------------------------------
def _loss_kernel(pred_ref, diri_ref, tgt_ref, out_ref, acc_ref, *,
                 batch, confidence, smoothing):
    i = pl.program_id(0)

    @pl.when(i == 0)
    def _():
        acc_ref[...] = jnp.zeros_like(acc_ref)

    p = pred_ref[...].astype(jnp.float32)                     # (TB, C)
    d = diri_ref[...].astype(jnp.float32)                     # (TB, C)
    tgt = tgt_ref[...]                                        # (TB, 1) int32

    # log_softmax over classes
    m = jnp.max(p, axis=-1, keepdims=True)
    lse = jnp.log(jnp.sum(jnp.exp(p - m), axis=-1, keepdims=True)) + m
    logp = p - lse

    TB, C = p.shape
    cols = lax.broadcasted_iota(jnp.int32, (TB, C), 1)
    onehot = cols == tgt                                      # (TB, C)
    logp_tgt = jnp.sum(jnp.where(onehot, logp, 0.0), axis=-1, keepdims=True)
    diri_term = jnp.sum(d * logp, axis=-1, keepdims=True)     # diri[target]==0

    row_loss = -(confidence * logp_tgt + smoothing * diri_term)   # (TB, 1)

    # Mask rows beyond the real batch (padding).
    row_idx = lax.broadcasted_iota(jnp.int32, (TB, 1), 0) + i * TB
    row_loss = jnp.where(row_idx < batch, row_loss, 0.0)

    acc_ref[...] += jnp.sum(row_loss).reshape(1, 1)

    @pl.when(i == pl.num_programs(0) - 1)
    def _():
        out_ref[...] = acc_ref[...] * (1.0 / batch)


def loss_pallas(pred, diri, target, *, confidence, smoothing, tb=None):
    B, C = pred.shape
    if tb is None:
        # Biggest multiple-of-8 row tile that keeps 2 inputs x 2 pipeline
        # buffers of f32 tiles well inside VMEM even on v7x (64 MiB phys).
        budget_rows = max(8, ((1 << 20) // max(C, 1)) // 8 * 8)
        tb = min(_round_up(B, 8), 512, budget_rows)
    b_pad = _round_up(B, tb)
    if b_pad != B:
        pad = b_pad - B
        pred = jnp.pad(pred, ((0, pad), (0, 0)))
        diri = jnp.pad(diri, ((0, pad), (0, 0)))
        target = jnp.pad(target, ((0, pad),))
    tgt2d = target.reshape(b_pad, 1).astype(jnp.int32)
    grid = (b_pad // tb,)

    # TODO(synk): on v7x a leading size-2 "parallel" axis (per-core partial
    # sums added in the wrapper) would use both TensorCores for very large B.
    out = pl.pallas_call(
        functools.partial(_loss_kernel, batch=B,
                          confidence=float(confidence),
                          smoothing=float(smoothing)),
        out_shape=jax.ShapeDtypeStruct((1, 1), jnp.float32),
        grid_spec=pltpu.PrefetchScalarGridSpec(
            num_scalar_prefetch=0,
            grid=grid,
            in_specs=[pl.BlockSpec((tb, C), lambda i: (i, 0)),
                      pl.BlockSpec((tb, C), lambda i: (i, 0)),
                      pl.BlockSpec((tb, 1), lambda i: (i, 0))],
            out_specs=pl.BlockSpec((1, 1), lambda i: (0, 0)),
            scratch_shapes=[pltpu.VMEM((1, 1), jnp.float32)]),
        compiler_params=pltpu.CompilerParams(
            dimension_semantics=("arbitrary",)),
    )(pred, diri, tgt2d)
    return out[0, 0]


# ----------------------------------------------------------------------------
# Glue: Dirichlet sample (no_grad block in the PyTorch code).
# ----------------------------------------------------------------------------
# TODO(synk): Dirichlet/gamma sampling has no Pallas TPU primitive; done in
# plain JAX.  The zero concentration at the target index is handled as its
# mathematical limit (that component is exactly 0); the confidence/smoothing
# mixing is fused into the Pallas loss kernel so no [B, C] true_dist is
# materialized in HBM.
def sample_dirichlet(key, confusion, target):
    C = confusion.shape[0]
    alphas = confusion[target]                                # (B, C)
    onehot = jax.nn.one_hot(target, C, dtype=jnp.float32)
    safe_alpha = jnp.where(onehot > 0.0, 1.0, jnp.maximum(alphas, 1e-30))
    g = jax.random.gamma(key, safe_alpha)                     # (B, C)
    g = g * (1.0 - onehot)                                    # target comp -> 0
    denom = jnp.maximum(jnp.sum(g, axis=-1, keepdims=True), 1e-30)
    return g / denom


class AdaptiveLabelLoss:
    """JAX/Pallas port of the PyTorch AdaptiveLabelLoss forward pass."""

    def __init__(self, classes, last_layer_weight, smoothing=0.0):
        self.cls = classes
        self.smoothing = float(smoothing)
        self.confidence = 1.0 - float(smoothing)
        # makeConfusion(T=1)
        self.confusion = make_confusion(last_layer_weight, T=1.0)

    def __call__(self, pred, target, key):
        diri = sample_dirichlet(key, self.confusion, target)
        return loss_pallas(pred, diri, target,
                           confidence=self.confidence,
                           smoothing=self.smoothing)


if __name__ == "__main__":
    B, C, H = 8, 10, 32   # batch, classes, hidden (last Linear: [C, H])

    key = jax.random.PRNGKey(0)
    k_w, k_pred, k_tgt, k_diri = jax.random.split(key, 4)

    # Deterministic "model" last linear-layer weight (list(params)[-2]).
    weight = 0.1 * jax.random.normal(k_w, (C, H), dtype=jnp.float32)
    pred = jax.random.normal(k_pred, (B, C), dtype=jnp.float32)
    target = jax.random.randint(k_tgt, (B,), 0, C, dtype=jnp.int32)

    criterion = AdaptiveLabelLoss(classes=C, last_layer_weight=weight,
                                  smoothing=0.1)
    loss = criterion(pred, target, k_diri)
    loss = jax.block_until_ready(loss)

    # Reference for the deterministic parts (same confusion matrix, same key
    # -> same Dirichlet draw) against plain JAX.
    diri = sample_dirichlet(k_diri, criterion.confusion, target)
    onehot = jax.nn.one_hot(target, C, dtype=jnp.float32)
    true_dist = diri * criterion.smoothing * (1.0 - onehot) \
        + onehot * criterion.confidence
    logp = jax.nn.log_softmax(pred, axis=-1)
    ref = jnp.mean(jnp.sum(-true_dist * logp, axis=-1))

    assert jnp.isfinite(loss), loss
    assert jnp.allclose(loss, ref, rtol=1e-5, atol=1e-5), (loss, ref)

    # Confusion-matrix invariants: zero diagonal, off-diag rows ~sum to 1
    # (bf16 matmul + approx reciprocal -> loose tolerance).
    conf = criterion.confusion
    assert jnp.allclose(jnp.diagonal(conf), 0.0, atol=1e-6)
    assert jnp.allclose(jnp.sum(conf, axis=-1), 1.0, atol=5e-2)

    print("KERNEL_OK")
</pallas_src>

<mosaic_0001>
module attributes {stable_mosaic.version = 11 : i64} {
  func.func @_confusion_kernel(%arg0: memref<10x32xf32, #tpu.memory_space<vmem>>, %arg1: memref<10x10xf32, #tpu.memory_space<vmem>>) attributes {dimension_semantics = [], scalar_prefetch = 0 : i64, scratch_operands = 0 : i64, tpu.core_type = #tpu.core_type<tc>} {
    %c0 = arith.constant 0 : index
    %c0_0 = arith.constant 0 : index
    %0 = vector.load %arg0[%c0, %c0_0] : memref<10x32xf32, #tpu.memory_space<vmem>>, vector<10x32xf32>
    %1 = arith.mulf %0, %0 : vector<10x32xf32>
    %cst = arith.constant dense<0.000000e+00> : vector<10xf32>
    %2 = vector.multi_reduction <add>, %1, %cst [1] : vector<10x32xf32> to vector<10xf32>
    %3 = vector.shape_cast %2 : vector<10xf32> to vector<10x1xf32>
    %cst_1 = arith.constant 9.99999996E-13 : f32
    %4 = vector.broadcast %cst_1 : f32 to vector<10x1xf32>
    %5 = arith.maximumf %3, %4 : vector<10x1xf32>
    %6 = math.rsqrt %5 : vector<10x1xf32>
    %7 = vector.broadcast %6 : vector<10x1xf32> to vector<10x32xf32>
    %8 = arith.mulf %0, %7 : vector<10x32xf32>
    %9 = arith.truncf %8 : vector<10x32xf32> to vector<10x32xbf16>
    %cst_2 = arith.constant dense<0.000000e+00> : vector<10x10xf32>
    %10 = tpu.matmul %9, %9, %cst_2 {dimension_numbers = #tpu.dot_dimension_numbers<[1], [1], [0], [0], [0, 0, 1, 0], [], []>} : vector<10x32xbf16>, vector<10x32xbf16>, vector<10x10xf32> -> vector<10x10xf32>
    %cst_3 = arith.constant 1.000000e+00 : f32
    %11 = vector.broadcast %cst_3 : f32 to vector<10x10xf32>
    %12 = arith.mulf %10, %11 : vector<10x10xf32>
    %cst_4 = arith.constant 1.000000e+00 : f32
    %13 = vector.broadcast %cst_4 : f32 to vector<10x10xf32>
    %14 = arith.subf %12, %13 : vector<10x10xf32>
    %15 = math.exp %14 : vector<10x10xf32>
    %cst_5 = arith.constant dense<0.000000e+00> : vector<10xf32>
    %16 = vector.multi_reduction <add>, %15, %cst_5 [1] : vector<10x10xf32> to vector<10xf32>
    %17 = vector.shape_cast %16 : vector<10xf32> to vector<10x1xf32>
    %cst_6 = arith.constant 1.000000e+00 : f32
    %18 = vector.broadcast %cst_6 : f32 to vector<10x1xf32>
    %19 = arith.subf %17, %18 : vector<10x1xf32>
    %cst_7 = arith.constant 9.99999968E-21 : f32
    %20 = vector.broadcast %cst_7 : f32 to vector<10x1xf32>
    %21 = arith.maximumf %19, %20 : vector<10x1xf32>
    %22 = tpu.reciprocal %21 {approx = true} : vector<10x1xf32> -> vector<10x1xf32>
    %23 = vector.broadcast %22 : vector<10x1xf32> to vector<10x10xf32>
    %24 = arith.mulf %15, %23 : vector<10x10xf32>
    %25 = tpu.iota {dimensions = array<i32: 0>} : vector<10x10xi32>
    %26 = tpu.iota {dimensions = array<i32: 1>} : vector<10x10xi32>
    %27 = arith.cmpi eq, %25, %26 : vector<10x10xi32>
    %cst_8 = arith.constant 0.000000e+00 : f32
    %28 = vector.broadcast %cst_8 : f32 to vector<10x10xf32>
    %29 = arith.select %27, %28, %24 : vector<10x10xi1>, vector<10x10xf32>
    %c0_9 = arith.constant 0 : index
    %c0_10 = arith.constant 0 : index
    %30 = vector.load %arg1[%c0_9, %c0_10] : memref<10x10xf32, #tpu.memory_space<vmem>>, vector<10x10xf32>
    tpu.vector_store %arg1[%c0_9, %c0_10], %29 {strides = array<i32>} : memref<10x10xf32, #tpu.memory_space<vmem>>, vector<10x10xf32>,
    return
  }
}

</mosaic_0001>

<llo_original>
// kernel: tpu_custom_call.1
$region0: #{tpu_custom_call.1}
  #allocation0 [shape = 'u32[]', space=smem, size = 0x4, offset = 0x4, fixed_abs, tag = 'smem constant byte address 0x4 - core index']
  #allocation1 [shape = 'u32[144,128]{1,0:T(1,128)}', space=vmem, size = 0x12000, scoped, tag = 'internal scratch']
  %s0 = inlined_call_operand.hbm [shape: f32[10,32], index: 0, kind: input, shape index: {}]
  %s1 = inlined_call_operand.hbm [shape: f32[10,10], index: 1, kind: output, shape index: {}]
  %s2 = sld [smem:[#allocation0]]
  $region18: #{tpu_custom_call.1} parent=0
    _
  %s4 = ssub.s32 1, %s2
  %s5 = scalar_select 0, %s4, %s2
  $region1: #{tpu_custom_call.1} parent=0
    #allocation2 [shape = 'u8[8192]{0}', space=vmem, size = 0x2000, scoped, tag = 'input window, operand 0, single buffered']
    #allocation3 [shape = 's32[1]{0}', space=sflag, size = 0x4, scoped, tag = 'scoped memory for tpu_custom_call.1']
    #allocation4 [shape = 's32[1]{0}', space=sflag, size = 0x4, scoped, tag = 'scoped memory for tpu_custom_call.1']
    #allocation5 [shape = 'u8[8192]{0}', space=vmem, size = 0x2000, scoped, tag = 'output window, operand 0, single buffered']
    %6 = vsyncpa [#allocation3], 0
    %7 = vsyncpa [#allocation4], 0
    // Predicated region
    $region2: #{tpu_custom_call.1} parent=1 // pred_check
      _
    $region3: #{tpu_custom_call.1} parent=1 // pred_check_branch
      %9 = sbr.rel (0) target = $region5
    $region4: #{tpu_custom_call.1} parent=1 // pred_region
      %s11 = ssub.s32 256, 256
      %12 = vsyncadd [#allocation3], %s11
      %s13 = sshll.u32 [#allocation2], 4
      %s14 = int_to_ptr.vmem [resolvable:$true] %s13
      %19 = dma.hbm_to_vmem [thread:$0]  %s0, 256, %s14, [#allocation3], 128, 128, 8
    $region5: #{tpu_custom_call.1} parent=1 // pred_fallthru
      _
    // Predicated region
    $region6: #{tpu_custom_call.1} parent=1 // pred_check
      _
    $region7: #{tpu_custom_call.1} parent=1 // pred_check_branch
      %21 = sbr.rel (0) target = $region9
    $region8: #{tpu_custom_call.1} parent=1 // pred_region
      %22 = dma.done [#allocation3], 256
    $region9: #{tpu_custom_call.1} parent=1 // pred_fallthru
      _
    %v24 = vld [vmem:[#allocation2] sm:$0xff]
    %v25 = vld [vmem:[#allocation2 + $0x8] sm:$0x3]
    %v26 = vmul.f32 %v24, %v24
    %v27 = vmul.f32 %v25, %v25
    %vm28 = vcmask 261120
    %v29 = vsel %vm28, %v26, 0.0
    %30 = vadd.xlane.f32.xlu0 %v29
    %v31 = vpop.xlane.xlu0 %30
    %vm32 = vcmask 254976
    %v33 = vsel %vm32, %v27, 0.0
    %34 = vadd.xlane.f32.xlu0 %v33
    %v35 = vpop.xlane.xlu0 %34
    %v36 = vmax.f32 %v31, 1e-12
    %v37 = vmax.f32 %v35, 1e-12
    %v38 = vrsqrt.pop %v36
    %v39 = vrsqrt.pop %v37
    %v40 = vmul.f32 %v24, %v38
    %v41 = vmul.f32 %v25, %v39
    %v42 = vpack.c.bf16 %v41, %v40
    %v44 = vsel %vm28, %v42, 0
    %46 = vmatprep.subr.bf16.mxu0 0
    %47 = vmatpush1.bf16.xpose.msra.mxu0 %v44
    %48 = vmatprep.subr.bf16.mxu0 0
    %49 = vmatpush1.bf16.xpose.msra.mxu0 0
    %50 = vmatprep.subr.bf16.mxu0 0
    %51 = vmatpush1.bf16.xpose.msra.mxu0 0
    %52 = vmatprep.subr.bf16.mxu0 0
    %53 = vmatpush1.bf16.xpose.msra.mxu0 0
    %54 = vmatprep.subr.bf16.mxu0 0
    %55 = vmatpush1.bf16.xpose.msra.mxu0 0
    %56 = vmatprep.subr.bf16.mxu0 0
    %57 = vmatpush1.bf16.xpose.msra.mxu0 0
    %58 = vmatprep.subr.bf16.mxu0 0
    %59 = vmatpush1.bf16.xpose.msra.mxu0 0
    %60 = vmatprep.subr.bf16.mxu0 0
    %61 = vmatpush1.bf16.xpose.msra.mxu0 0
    %62 = vmatprep.subr.bf16.mxu0 0
    %63 = vmatpush1.bf16.xpose.msra.mxu0 0
    %64 = vmatprep.subr.bf16.mxu0 0
    %65 = vmatpush1.bf16.xpose.msra.mxu0 0
    %66 = vmatprep.subr.bf16.mxu0 0
    %67 = vmatpush1.bf16.xpose.msra.mxu0 0
    %68 = vmatprep.subr.bf16.mxu0 0
    %69 = vmatpush1.bf16.xpose.msra.mxu0 0
    %70 = vmatprep.subr.bf16.mxu0 0
    %71 = vmatpush1.bf16.xpose.msra.mxu0 0
    %72 = vmatprep.subr.bf16.mxu0 0
    %73 = vmatpush1.bf16.xpose.msra.mxu0 0
    %74 = vmatprep.subr.bf16.mxu0 0
    %75 = vmatpush1.bf16.xpose.msra.mxu0 0
    %76 = vmatprep.subr.bf16.mxu0 0
    %77 = vmatpush1.bf16.xpose.msra.mxu0 0
    %78 = vmatprep.mubr.bf16.mxu0 0
    %79 = vmatmul.mubr.bf16.gmra.mrb[0].mxu0 %v44
    %v80 = vpop.f32.mrb[0].mxu0
    %v81 = vadd.f32 0.0, %v80
    %v82 = vpop.f32.mrb[0].mxu0
    %v83 = vpop.f32.mrb[0].mxu0
    %v84 = vadd.f32 0.0, %v83
    %v85 = vpop.f32.mrb[0].mxu0
    %86 = vdwg.mxu0
    %v87 = vsub.f32 %v81, 1.0
    %v88 = vsub.f32 %v84, 1.0
    %v89 = vmul.f32 %v87, 1.442695
    %v90 = vpow.pop %v89
    %v91 = vmul.f32 %v88, 1.442695
    %v92 = vpow.pop %v91
    %vm93 = vcmask 80896
    %v94 = vsel %vm93, %v90, 0.0
    %95 = vadd.xlane.f32.xlu0 %v94
    %v96 = vpop.xlane.xlu0 %95
    %vm97 = vcmask 74752
    %v98 = vsel %vm97, %v92, 0.0
    %99 = vadd.xlane.f32.xlu0 %v98
    %v100 = vpop.xlane.xlu0 %99
    %v101 = vsub.f32 %v96, 1.0
    %v102 = vsub.f32 %v100, 1.0
    %v103 = vmax.f32 %v101, 1e-20
    %v104 = vmax.f32 %v102, 1e-20
    %v105 = vrcp.pop %v103
    %v106 = vrcp.pop %v104
    %v107 = vmul.f32 %v90, %v105
    %v108 = vmul.f32 %v92, %v106
    %v109 = vlaneseq
    %v110 = vshrl.u32 %v109, 7
    %v111 = vadd.s32 %v110, 8
    %v112 = vlaneseq
    %v113 = vand.u32 %v112, 127
    %vm114 = vcmp.eq.s32.totalorder %v110, %v113
    %vm115 = vcmp.eq.s32.totalorder %v111, %v113
    %v116 = vsel %vm114, 0.0, %v107
    %v117 = vsel %vm115, 0.0, %v108
    %118 = vst.msk [vmem:[#allocation5] sm:$0xff] %vm93, %v116
    %119 = vst.msk [vmem:[#allocation5 + $0x8] sm:$0x3] %vm97, %v117
    // Predicated region
    $region10: #{tpu_custom_call.1} parent=1 // pred_check
      _
    $region11: #{tpu_custom_call.1} parent=1 // pred_check_branch
      %121 = sbr.rel (0) target = $region13
    $region12: #{tpu_custom_call.1} parent=1 // pred_region
      %s123 = ssub.s32 256, 256
      %124 = vsyncadd [#allocation4], %s123
      %s125 = sshll.u32 [#allocation5], 4
      %s126 = int_to_ptr.vmem [resolvable:$true] %s125
      %131 = dma.vmem_to_hbm [thread:$0]  %s126, 256, %s1, [#allocation4], 128, 128, 8
    $region13: #{tpu_custom_call.1} parent=1 // pred_fallthru
      _
    // Predicated region
    $region14: #{tpu_custom_call.1} parent=1 // pred_check
      _
    $region15: #{tpu_custom_call.1} parent=1 // pred_check_branch
      %133 = sbr.rel (0) target = $region17
    $region16: #{tpu_custom_call.1} parent=1 // pred_region
      %134 = dma.done [#allocation4], 256
    $region17: #{tpu_custom_call.1} parent=1 // pred_fallthru
      _
    %135 = vsyncpa [#allocation3], 1
    %136 = vsyncpa [#allocation4], 1

</llo_original>
